<compile_context>
chip_gen: v7x
topology: tpu7x:2x2x1
jax: 0.10.0
libtpu: 0.0.40
codegen_flags: <defaults>
</compile_context>

<pallas_src>
import jax
import jax.numpy as jnp
from jax.experimental import pallas as pl
from jax.experimental.pallas import tpu as pltpu


def _copy_kernel(x_ref, o_ref):
    # Whole-block, lane-dense identity copy — one contiguous DMA + full-vreg stores.
    o_ref[...] = x_ref[...]


def pixel_shuffle(x: jax.Array, *, target_block_bytes: int = 2 * 1024 * 1024) -> jax.Array:
    """(n, c, w) -> (n, c//2, 2w), matching PyTorch's contiguous .view()."""
    N, C, W = x.shape
    assert C % 2 == 0, "channel dim must be even"
    C_half, W2 = C // 2, 2 * W

    total = N * C * W
    itemsize = jnp.dtype(x.dtype).itemsize

    # --- Lane-dense 2-D factorization of the contiguous byte stream ----------
    LANE = 128
    if total % LANE == 0:
        cols = LANE
        # Grow the lane dimension (largest power-of-two multiple of 128 that
        # divides `total`, capped) so stores stay unmasked and lane-dense.
        while cols * 2 <= min(total, 4096) and total % (cols * 2) == 0:
            cols *= 2
    else:
        # Fall back to a single full-extent block (always a legal block shape).
        cols = total
    rows = total // cols

    # --- Row tiling: big blocks, sublane-aligned when tiled -------------------
    max_tr = max(1, target_block_bytes // (cols * itemsize))
    if rows <= max_tr:
        tr = rows  # whole extent — always a legal block shape
    else:
        tr = None
        start = min(rows, max_tr)
        start -= start % 8  # keep the sublane dim a multiple of 8
        for cand in range(start, 0, -8):
            if rows % cand == 0:
                tr = cand
                break
        if tr is None:
            tr = rows  # no aligned divisor: fall back to one full-extent block

    grid = (rows // tr,)

    flat = x.reshape(rows, cols)  # free: contiguous reinterpretation

    out_flat = pl.pallas_call(
        _copy_kernel,
        out_shape=jax.ShapeDtypeStruct((rows, cols), x.dtype),
        grid=grid,
        in_specs=[pl.BlockSpec((tr, cols), lambda i: (i, 0))],
        out_specs=pl.BlockSpec((tr, cols), lambda i: (i, 0)),
        compiler_params=pltpu.CompilerParams(
            dimension_semantics=("parallel",),
            # Allow 2-deep buffering of multi-MiB tiles; 2 MiB tiles * 2 bufs * 2
            # arrays = 8 MiB, comfortably under v7x's 64 MiB physical VMEM.
            vmem_limit_bytes=64 * 1024 * 1024,
        ),
    )(flat)

    return out_flat.reshape(N, C_half, W2)  # free: contiguous reinterpretation


if __name__ == "__main__":
    key = jax.random.PRNGKey(0)
    # Small shape consistent with the module's 3-D (n, c, w) input.
    x = jax.random.normal(key, (2, 4, 16), dtype=jnp.float32)

    out = pixel_shuffle(x)
    out = jax.block_until_ready(out)

    # Reference: exactly what the PyTorch contiguous .view does.
    ref = x.reshape(2, 4 // 2, 16 * 2)

    assert out.shape == ref.shape, (out.shape, ref.shape)
    assert out.dtype == ref.dtype, (out.dtype, ref.dtype)
    if not bool(jnp.array_equal(out, ref)):
        raise AssertionError("Pallas PixelShuffle does not match reference reshape")

    print("KERNEL_OK")
</pallas_src>

<mosaic_0001>
module attributes {stable_mosaic.version = 11 : i64} {
  func.func @_copy_kernel(%arg0: i32, %arg1: memref<1x128xf32, #tpu.memory_space<vmem>>, %arg2: memref<1x128xf32, #tpu.memory_space<vmem>>) attributes {dimension_semantics = [#tpu.dimension_semantics<parallel>], iteration_bounds = array<i64: 1>, scalar_prefetch = 0 : i64, scratch_operands = 0 : i64, tpu.core_type = #tpu.core_type<tc>, window_params = [{transform_indices = @transform_0, window_bounds = array<i64: 1, 128>}, {transform_indices = @transform_1, window_bounds = array<i64: 1, 128>}]} {
    %c0 = arith.constant 0 : index
    %c0_0 = arith.constant 0 : index
    %0 = vector.load %arg1[%c0, %c0_0] : memref<1x128xf32, #tpu.memory_space<vmem>>, vector<1x128xf32>
    %c0_1 = arith.constant 0 : index
    %c0_2 = arith.constant 0 : index
    %1 = vector.load %arg2[%c0_1, %c0_2] : memref<1x128xf32, #tpu.memory_space<vmem>>, vector<1x128xf32>
    tpu.vector_store %arg2[%c0_1, %c0_2], %0 {strides = array<i32>} : memref<1x128xf32, #tpu.memory_space<vmem>>, vector<1x128xf32>,
    return
  }
  func.func @transform_0(%arg0: i32) -> (i32, i32) {
    %c0_i32 = arith.constant 0 : i32
    %c0_i32_0 = arith.constant 0 : i32
    return %arg0, %c0_i32 : i32, i32
  }
  func.func @transform_1(%arg0: i32) -> (i32, i32) {
    %c0_i32 = arith.constant 0 : i32
    %c0_i32_0 = arith.constant 0 : i32
    return %arg0, %c0_i32 : i32, i32
  }
}

</mosaic_0001>

<llo_original>
// kernel: tpu_custom_call.1
$region0: #{tpu_custom_call.1}
  #allocation0 [shape = 'u32[]', space=smem, size = 0x4, offset = 0x4, fixed_abs, tag = 'smem constant byte address 0x4 - core index']
  #allocation1 [shape = 'u32[144,128]{1,0:T(1,128)}', space=vmem, size = 0x12000, scoped, tag = 'internal scratch']
  %s0 = inlined_call_operand.hbm [shape: f32[1,128], index: 0, kind: input, shape index: {}]
  %s1 = inlined_call_operand.hbm [shape: f32[1,128], index: 1, kind: output, shape index: {}]
  %s2 = sld [smem:[#allocation0]]
  $region18: #{tpu_custom_call.1} parent=0
    _
  %s4 = ssub.s32 1, %s2
  %s5 = scalar_select 0, %s4, %s2
  $region1: #{tpu_custom_call.1} parent=0
    #allocation2 [shape = 'u8[512]{0}', space=vmem, size = 0x400, scoped, tag = 'input window, operand 0, single buffered']
    #allocation3 [shape = 's32[1]{0}', space=sflag, size = 0x4, scoped, tag = 'scoped memory for tpu_custom_call.1']
    #allocation4 [shape = 's32[1]{0}', space=sflag, size = 0x4, scoped, tag = 'scoped memory for tpu_custom_call.1']
    #allocation5 [shape = 'u8[512]{0}', space=vmem, size = 0x400, scoped, tag = 'output window, operand 0, single buffered']
    %6 = vsyncpa [#allocation3], 0
    %7 = vsyncpa [#allocation4], 0
    // Predicated region
    $region2: #{tpu_custom_call.1} parent=1 // pred_check
      _
    $region3: #{tpu_custom_call.1} parent=1 // pred_check_branch
      %9 = sbr.rel (0) target = $region5
    $region4: #{tpu_custom_call.1} parent=1 // pred_region
      %s11 = ssub.s32 16, 16
      %12 = vsyncadd [#allocation3], %s11
      %s14 = sshll.u32 [#allocation2], 4
      %s15 = int_to_ptr.vmem [resolvable:$true] %s14
      %17 = dma.hbm_to_vmem [thread:$0]  %s0, 16, %s15, [#allocation3]
    $region5: #{tpu_custom_call.1} parent=1 // pred_fallthru
      _
    // Predicated region
    $region6: #{tpu_custom_call.1} parent=1 // pred_check
      _
    $region7: #{tpu_custom_call.1} parent=1 // pred_check_branch
      %19 = sbr.rel (0) target = $region9
    $region8: #{tpu_custom_call.1} parent=1 // pred_region
      %20 = dma.done [#allocation3], 16
    $region9: #{tpu_custom_call.1} parent=1 // pred_fallthru
      _
    %v21 = vld [vmem:[#allocation2] sm:$0x1]
    %22 = vst [vmem:[#allocation5] sm:$0x1] %v21
    // Predicated region
    $region10: #{tpu_custom_call.1} parent=1 // pred_check
      _
    $region11: #{tpu_custom_call.1} parent=1 // pred_check_branch
      %24 = sbr.rel (0) target = $region13
    $region12: #{tpu_custom_call.1} parent=1 // pred_region
      %s26 = ssub.s32 16, 16
      %27 = vsyncadd [#allocation4], %s26
      %s29 = sshll.u32 [#allocation5], 4
      %s30 = int_to_ptr.vmem [resolvable:$true] %s29
      %32 = dma.vmem_to_hbm [thread:$0]  %s30, 16, %s1, [#allocation4]
    $region13: #{tpu_custom_call.1} parent=1 // pred_fallthru
      _
    // Predicated region
    $region14: #{tpu_custom_call.1} parent=1 // pred_check
      _
    $region15: #{tpu_custom_call.1} parent=1 // pred_check_branch
      %34 = sbr.rel (0) target = $region17
    $region16: #{tpu_custom_call.1} parent=1 // pred_region
      %35 = dma.done [#allocation4], 16
    $region17: #{tpu_custom_call.1} parent=1 // pred_fallthru
      _
    %36 = vsyncpa [#allocation3], 1
    %37 = vsyncpa [#allocation4], 1

</llo_original>
